<compile_context>
chip_gen: v6e
topology: v6e:2x2x1
jax: 0.10.0
libtpu: 0.0.40
codegen_flags: <defaults>
</compile_context>

<pallas_src>
import jax
import jax.numpy as jnp
from jax.experimental import pallas as pl
from jax.experimental.pallas import tpu as pltpu


def p_net_kernel(x_ref, w1_ref, b1_ref, w2_ref, b2_ref, o_ref):
    # fc1 + ReLU  (MXU matmul, f32 accumulation; biases stay f32)
    x = x_ref[...]
    h = jnp.dot(x, w1_ref[...], preferred_element_type=jnp.float32) + b1_ref[...]
    h = jnp.maximum(h, 0.0)
    # fc2 — cast h to the weight dtype so bf16 weights keep the MXU in bf16;
    # this is a no-op for the f32 path.
    logits = (
        jnp.dot(h.astype(w2_ref.dtype), w2_ref[...],
                preferred_element_type=jnp.float32)
        + b2_ref[...]
    )
    # softmax over dim=1 (feature axis), numerically stable, exact normalization
    m = jnp.max(logits, axis=1, keepdims=True)
    e = jnp.exp(logits - m)
    denom = jnp.sum(e, axis=1, keepdims=True)
    o_ref[...] = (e / denom).astype(o_ref.dtype)


def _round_up(n, m):
    return pl.cdiv(n, m) * m


def p_net_forward(x, w1, b1, w2, b2, *, block_batch=4096):
    """P_net forward pass.

    block_batch: rows per grid step.  Large (2048-8192) is best on every
    generation — the kernel is step-overhead bound, not VMEM/HBM bound.
    The tile is also capped at ceil(batch/2) so the batch axis always has
    >= 2 grid steps (megacore split on v7x) when batch > 8.
    """
    batch, input_dim = x.shape
    hidden_dim = w1.shape[1]
    output_dim = w2.shape[1]

    # Batch tile: 8-row aligned, at most half the batch (>=2 grid steps when
    # possible), at most block_batch.
    tb = max(8, min(_round_up(block_batch, 8), _round_up(pl.cdiv(batch, 2), 8)))
    grid = (pl.cdiv(batch, tb),)  # partial final block handled by Pallas; no pad copy

    out = pl.pallas_call(
        p_net_kernel,
        out_shape=jax.ShapeDtypeStruct((batch, output_dim), jnp.float32),
        grid=grid,
        in_specs=[
            # x: tiled along batch (auto double-buffered DMA pipeline)
            pl.BlockSpec((tb, input_dim), lambda i: (i, 0)),
            # weights/biases: constant index map -> DMA'd once, VMEM-resident
            pl.BlockSpec((input_dim, hidden_dim), lambda i: (0, 0)),
            pl.BlockSpec((1, hidden_dim), lambda i: (0, 0)),
            pl.BlockSpec((hidden_dim, output_dim), lambda i: (0, 0)),
            pl.BlockSpec((1, output_dim), lambda i: (0, 0)),
        ],
        out_specs=pl.BlockSpec((tb, output_dim), lambda i: (i, 0)),
        compiler_params=pltpu.CompilerParams(
            dimension_semantics=("parallel",),   # megacore split on v7x
            vmem_limit_bytes=32 * 1024 * 1024,   # headroom for big tiles on v5e
        ),
    )(x, w1, b1, w2, b2)

    return out


def init_params(key, input_dim, hidden_dim, output_dim):
    # Deterministic init mimicking torch.nn.Linear: U(-1/sqrt(fan_in), 1/sqrt(fan_in))
    k1, k2, k3, k4 = jax.random.split(key, 4)
    bound1 = 1.0 / jnp.sqrt(input_dim)
    bound2 = 1.0 / jnp.sqrt(hidden_dim)
    # stored as (in_features, out_features) == torch weight transposed
    w1 = jax.random.uniform(k1, (input_dim, hidden_dim), jnp.float32, -bound1, bound1)
    b1 = jax.random.uniform(k2, (1, hidden_dim), jnp.float32, -bound1, bound1)
    w2 = jax.random.uniform(k3, (hidden_dim, output_dim), jnp.float32, -bound2, bound2)
    b2 = jax.random.uniform(k4, (1, output_dim), jnp.float32, -bound2, bound2)
    return w1, b1, w2, b2


def _reference(x, w1, b1, w2, b2):
    h = jnp.maximum(x @ w1 + b1, 0.0)
    return jax.nn.softmax(h @ w2 + b2, axis=1)


if __name__ == "__main__":
    input_dim = 32
    hidden_dim = 128
    output_dim = 8

    key = jax.random.PRNGKey(0)
    kx, kp, kx2 = jax.random.split(key, 3)
    w1, b1, w2, b2 = init_params(kp, input_dim, hidden_dim, output_dim)

    # Case 1: small batch, single tile.
    batch = 8
    x = jax.random.normal(kx, (batch, input_dim), jnp.float32)
    out = jax.block_until_ready(p_net_forward(x, w1, b1, w2, b2))
    ref = _reference(x, w1, b1, w2, b2)
    assert out.shape == (batch, output_dim)
    assert jnp.allclose(out, ref, atol=2e-3, rtol=2e-3)
    assert jnp.allclose(jnp.sum(out, axis=1), 1.0, atol=1e-3)

    # Case 2: non-divisible batch with a multi-step grid and a partial final
    # block (no wrapper-side padding copy of x).  Small block_batch only to
    # force grid > 1 here; production default stays at 4096.
    batch2 = 200
    x2 = jax.random.normal(kx2, (batch2, input_dim), jnp.float32)
    out2 = jax.block_until_ready(
        p_net_forward(x2, w1, b1, w2, b2, block_batch=64)
    )
    ref2 = _reference(x2, w1, b1, w2, b2)
    assert out2.shape == (batch2, output_dim)
    assert jnp.allclose(out2, ref2, atol=2e-3, rtol=2e-3)
    assert jnp.allclose(jnp.sum(out2, axis=1), 1.0, atol=1e-3)

    # Case 3: bf16 activations/weights (halves the dominant x HBM stream and
    # hits native MXU rate); biases and accumulation stay f32, output is f32.
    out3 = jax.block_until_ready(
        p_net_forward(
            x2.astype(jnp.bfloat16),
            w1.astype(jnp.bfloat16), b1,
            w2.astype(jnp.bfloat16), b2,
        )
    )
    assert out3.shape == (batch2, output_dim)
    assert jnp.allclose(jnp.sum(out3, axis=1), 1.0, atol=5e-3)
    assert jnp.allclose(out3, ref2, atol=5e-2)

    print("KERNEL_OK")
</pallas_src>

<mosaic_0001>
module attributes {stable_mosaic.version = 11 : i64} {
  func.func @p_net_kernel(%arg0: i32, %arg1: memref<8x32xf32, #tpu.memory_space<vmem>>, %arg2: memref<32x128xf32, #tpu.memory_space<vmem>>, %arg3: memref<1x128xf32, #tpu.memory_space<vmem>>, %arg4: memref<128x8xf32, #tpu.memory_space<vmem>>, %arg5: memref<1x8xf32, #tpu.memory_space<vmem>>, %arg6: memref<8x8xf32, #tpu.memory_space<vmem>>) attributes {dimension_semantics = [#tpu.dimension_semantics<parallel>], iteration_bounds = array<i64: 1>, scalar_prefetch = 0 : i64, scratch_operands = 0 : i64, tpu.core_type = #tpu.core_type<tc>, window_params = [{transform_indices = @transform_0, window_bounds = array<i64: 8, 32>}, {pipeline_mode = #tpu.pipeline_mode<synchronous>, transform_indices = @transform_1, window_bounds = array<i64: 32, 128>}, {pipeline_mode = #tpu.pipeline_mode<synchronous>, transform_indices = @transform_2, window_bounds = array<i64: 1, 128>}, {pipeline_mode = #tpu.pipeline_mode<synchronous>, transform_indices = @transform_3, window_bounds = array<i64: 128, 8>}, {pipeline_mode = #tpu.pipeline_mode<synchronous>, transform_indices = @transform_4, window_bounds = array<i64: 1, 8>}, {transform_indices = @transform_5, window_bounds = array<i64: 8, 8>}]} {
    %c0 = arith.constant 0 : index
    %c0_0 = arith.constant 0 : index
    %0 = vector.load %arg1[%c0, %c0_0] : memref<8x32xf32, #tpu.memory_space<vmem>>, vector<8x32xf32>
    %c0_1 = arith.constant 0 : index
    %c0_2 = arith.constant 0 : index
    %1 = vector.load %arg2[%c0_1, %c0_2] : memref<32x128xf32, #tpu.memory_space<vmem>>, vector<32x128xf32>
    %cst = arith.constant dense<0.000000e+00> : vector<8x128xf32>
    %2 = tpu.matmul %0, %1, %cst {dimension_numbers = #tpu.dot_dimension_numbers<[1], [0], [0], [1], [0, 0, 1, 1], [], []>} : vector<8x32xf32>, vector<32x128xf32>, vector<8x128xf32> -> vector<8x128xf32>
    %c0_3 = arith.constant 0 : index
    %c0_4 = arith.constant 0 : index
    %3 = vector.load %arg3[%c0_3, %c0_4] : memref<1x128xf32, #tpu.memory_space<vmem>>, vector<1x128xf32>
    %4 = vector.broadcast %3 : vector<1x128xf32> to vector<8x128xf32>
    %5 = arith.addf %2, %4 : vector<8x128xf32>
    %cst_5 = arith.constant 0.000000e+00 : f32
    %6 = vector.broadcast %cst_5 : f32 to vector<8x128xf32>
    %7 = arith.maximumf %5, %6 : vector<8x128xf32>
    %c0_6 = arith.constant 0 : index
    %c0_7 = arith.constant 0 : index
    %8 = vector.load %arg4[%c0_6, %c0_7] : memref<128x8xf32, #tpu.memory_space<vmem>>, vector<128x8xf32>
    %cst_8 = arith.constant dense<0.000000e+00> : vector<8x8xf32>
    %9 = tpu.matmul %7, %8, %cst_8 {dimension_numbers = #tpu.dot_dimension_numbers<[1], [0], [0], [1], [0, 0, 1, 1], [], []>} : vector<8x128xf32>, vector<128x8xf32>, vector<8x8xf32> -> vector<8x8xf32>
    %c0_9 = arith.constant 0 : index
    %c0_10 = arith.constant 0 : index
    %10 = vector.load %arg5[%c0_9, %c0_10] : memref<1x8xf32, #tpu.memory_space<vmem>>, vector<1x8xf32>
    %11 = vector.broadcast %10 : vector<1x8xf32> to vector<8x8xf32>
    %12 = arith.addf %9, %11 : vector<8x8xf32>
    %cst_11 = arith.constant dense<0xFF800000> : vector<8xf32>
    %13 = vector.multi_reduction <maximumf>, %12, %cst_11 [1] : vector<8x8xf32> to vector<8xf32>
    %14 = vector.shape_cast %13 : vector<8xf32> to vector<8x1xf32>
    %15 = vector.broadcast %14 : vector<8x1xf32> to vector<8x8xf32>
    %16 = arith.subf %12, %15 : vector<8x8xf32>
    %17 = math.exp %16 : vector<8x8xf32>
    %cst_12 = arith.constant dense<0.000000e+00> : vector<8xf32>
    %18 = vector.multi_reduction <add>, %17, %cst_12 [1] : vector<8x8xf32> to vector<8xf32>
    %19 = vector.shape_cast %18 : vector<8xf32> to vector<8x1xf32>
    %20 = vector.broadcast %19 : vector<8x1xf32> to vector<8x8xf32>
    %21 = arith.divf %17, %20 : vector<8x8xf32>
    %c0_13 = arith.constant 0 : index
    %c0_14 = arith.constant 0 : index
    %22 = vector.load %arg6[%c0_13, %c0_14] : memref<8x8xf32, #tpu.memory_space<vmem>>, vector<8x8xf32>
    tpu.vector_store %arg6[%c0_13, %c0_14], %21 {strides = array<i32>} : memref<8x8xf32, #tpu.memory_space<vmem>>, vector<8x8xf32>,
    return
  }
  func.func @transform_0(%arg0: i32) -> (i32, i32) {
    %c0_i32 = arith.constant 0 : i32
    %c0_i32_0 = arith.constant 0 : i32
    return %arg0, %c0_i32 : i32, i32
  }
  func.func @transform_1(%arg0: i32) -> (i32, i32) {
    %c0_i32 = arith.constant 0 : i32
    %c0_i32_0 = arith.constant 0 : i32
    %c0_i32_1 = arith.constant 0 : i32
    return %c0_i32, %c0_i32_0 : i32, i32
  }
  func.func @transform_2(%arg0: i32) -> (i32, i32) {
    %c0_i32 = arith.constant 0 : i32
    %c0_i32_0 = arith.constant 0 : i32
    %c0_i32_1 = arith.constant 0 : i32
    return %c0_i32, %c0_i32_0 : i32, i32
  }
  func.func @transform_3(%arg0: i32) -> (i32, i32) {
    %c0_i32 = arith.constant 0 : i32
    %c0_i32_0 = arith.constant 0 : i32
    %c0_i32_1 = arith.constant 0 : i32
    return %c0_i32, %c0_i32_0 : i32, i32
  }
  func.func @transform_4(%arg0: i32) -> (i32, i32) {
    %c0_i32 = arith.constant 0 : i32
    %c0_i32_0 = arith.constant 0 : i32
    %c0_i32_1 = arith.constant 0 : i32
    return %c0_i32, %c0_i32_0 : i32, i32
  }
  func.func @transform_5(%arg0: i32) -> (i32, i32) {
    %c0_i32 = arith.constant 0 : i32
    %c0_i32_0 = arith.constant 0 : i32
    return %arg0, %c0_i32 : i32, i32
  }
}

</mosaic_0001>

<llo_original>
// kernel: tpu_custom_call.1
$region0: #{tpu_custom_call.1}
  #allocation0 [shape = 'u32[]', space=smem, size = 0x4, offset = 0x4, fixed_abs, tag = 'smem constant byte address 0x4 - core index']
  #allocation1 [shape = 'u32[144,128]{1,0:T(1,128)}', space=vmem, size = 0x12000, scoped, tag = 'internal scratch']
  %s0 = inlined_call_operand.vmem [shape: f32[8,32], index: 0, kind: input, shape index: {}]
  %s1 = inlined_call_operand.vmem [shape: f32[32,128], index: 1, kind: input, shape index: {}]
  %s2 = inlined_call_operand.vmem [shape: f32[1,128], index: 2, kind: input, shape index: {}]
  %s3 = inlined_call_operand.vmem [shape: f32[128,8], index: 3, kind: input, shape index: {}]
  %s4 = inlined_call_operand.vmem [shape: f32[1,8], index: 4, kind: input, shape index: {}]
  %s5 = inlined_call_operand.hbm [shape: f32[8,8], index: 5, kind: output, shape index: {}]
  %s6 = sld [smem:[#allocation0]]
  $region30: #{tpu_custom_call.1} parent=0
    _
  %s8 = ssub.s32 1, %s6
  %s9 = scalar_select 0, %s8, %s6
  $region1: #{tpu_custom_call.1} parent=0
    #allocation2 [shape = 'u8[4096]{0}', space=vmem, size = 0x1000, scoped, tag = 'output window, operand 0, single buffered']
    #allocation3 [shape = 's32[1]{0}', space=sflag, size = 0x4, scoped, tag = 'scoped memory for tpu_custom_call.1']
    %10 = vsyncpa [#allocation3], 0
    // Predicated region
    $region2: #{tpu_custom_call.1} parent=1 // pred_check
      _
    $region3: #{tpu_custom_call.1} parent=1 // pred_check_branch
      %12 = sbr.rel (0) target = $region5
    $region4: #{tpu_custom_call.1} parent=1 // pred_region
      _
    $region5: #{tpu_custom_call.1} parent=1 // pred_fallthru
      _
    // Predicated region
    $region6: #{tpu_custom_call.1} parent=1 // pred_check
      _
    $region7: #{tpu_custom_call.1} parent=1 // pred_check_branch
      %14 = sbr.rel (0) target = $region9
    $region8: #{tpu_custom_call.1} parent=1 // pred_region
      _
    $region9: #{tpu_custom_call.1} parent=1 // pred_fallthru
      _
    // Predicated region
    $region10: #{tpu_custom_call.1} parent=1 // pred_check
      _
    $region11: #{tpu_custom_call.1} parent=1 // pred_check_branch
      %16 = sbr.rel (0) target = $region13
    $region12: #{tpu_custom_call.1} parent=1 // pred_region
      _
    $region13: #{tpu_custom_call.1} parent=1 // pred_fallthru
      _
    // Predicated region
    $region14: #{tpu_custom_call.1} parent=1 // pred_check
      _
    $region15: #{tpu_custom_call.1} parent=1 // pred_check_branch
      %18 = sbr.rel (0) target = $region17
    $region16: #{tpu_custom_call.1} parent=1 // pred_region
      _
    $region17: #{tpu_custom_call.1} parent=1 // pred_fallthru
      _
    // Predicated region
    $region18: #{tpu_custom_call.1} parent=1 // pred_check
      _
    $region19: #{tpu_custom_call.1} parent=1 // pred_check_branch
      %20 = sbr.rel (0) target = $region21
    $region20: #{tpu_custom_call.1} parent=1 // pred_region
      _
    $region21: #{tpu_custom_call.1} parent=1 // pred_fallthru
      _
    %v21 = vld [vmem:[%s0] sm:$0xff]
    %v22 = vld [vmem:[%s1] sm:$0xff]
    %v23 = vld [vmem:[%s1 + $0x8] sm:$0xff]
    %v24 = vld [vmem:[%s1 + $0x10] sm:$0xff]
    %v25 = vld [vmem:[%s1 + $0x18] sm:$0xff]
    %v26 = vld [vmem:[%s2] sm:$0x1]
    %v28 = vlaneseq
    %v29 = vshrl.u32 %v28, 7
    %v30 = vsub.s32 0, %v29
    %v31 = vrot.slane %v26, %v30
    %vm33 = vcmask 261120
    %v35 = vsel %vm33, %v21, 0
    %37 = vmatprep.subr.mxu0 0.0
    %38 = vmatpush1.msra.mxu0 0.0
    %39 = vmatprep.subr.mxu0 0.0
    %40 = vmatpush1.msra.mxu0 0.0
    %41 = vmatprep.subr.mxu0 0.0
    %42 = vmatpush1.msra.mxu0 0.0
    %43 = vmatprep.subr.mxu0 0.0
    %44 = vmatpush1.msra.mxu0 0.0
    %45 = vmatprep.subr.mxu0 0.0
    %46 = vmatpush1.msra.mxu0 0.0
    %47 = vmatprep.subr.mxu0 0.0
    %48 = vmatpush1.msra.mxu0 0.0
    %49 = vmatprep.subr.mxu0 0.0
    %50 = vmatpush1.msra.mxu0 0.0
    %51 = vmatprep.subr.mxu0 0.0
    %52 = vmatpush1.msra.mxu0 0.0
    %53 = vmatprep.subr.mxu0 0.0
    %54 = vmatpush1.msra.mxu0 0.0
    %55 = vmatprep.subr.mxu0 0.0
    %56 = vmatpush1.msra.mxu0 0.0
    %57 = vmatprep.subr.mxu0 0.0
    %58 = vmatpush1.msra.mxu0 0.0
    %59 = vmatprep.subr.mxu0 0.0
    %60 = vmatpush1.msra.mxu0 0.0
    %61 = vmatprep.subr.mxu0 0.0
    %62 = vmatpush1.msra.mxu0 %v25
    %63 = vmatprep.subr.mxu0 0.0
    %64 = vmatpush1.msra.mxu0 %v24
    %65 = vmatprep.subr.mxu0 0.0
    %66 = vmatpush1.msra.mxu0 %v23
    %67 = vmatprep.subr.mxu0 0.0
    %68 = vmatpush1.msra.mxu0 %v22
    %69 = vmatprep.subr.mxu0 0.0
    %70 = vmatpush2.msra.mxu0 0.0
    %71 = vmatprep.subr.mxu0 0.0
    %72 = vmatpush2.msra.mxu0 0.0
    %73 = vmatprep.subr.mxu0 0.0
    %74 = vmatpush2.msra.mxu0 0.0
    %75 = vmatprep.subr.mxu0 0.0
    %76 = vmatpush2.msra.mxu0 0.0
    %77 = vmatprep.subr.mxu0 0.0
    %78 = vmatpush2.msra.mxu0 0.0
    %79 = vmatprep.subr.mxu0 0.0
    %80 = vmatpush2.msra.mxu0 0.0
    %81 = vmatprep.subr.mxu0 0.0
    %82 = vmatpush2.msra.mxu0 0.0
    %83 = vmatprep.subr.mxu0 0.0
    %84 = vmatpush2.msra.mxu0 0.0
    %85 = vmatprep.subr.mxu0 0.0
    %86 = vmatpush2.msra.mxu0 0.0
    %87 = vmatprep.subr.mxu0 0.0
    %88 = vmatpush2.msra.mxu0 0.0
    %89 = vmatprep.subr.mxu0 0.0
    %90 = vmatpush2.msra.mxu0 0.0
    %91 = vmatprep.subr.mxu0 0.0
    %92 = vmatpush2.msra.mxu0 0.0
    %93 = vmatprep.subr.mxu0 0.0
    %94 = vmatpush2.msra.mxu0 0.0
    %95 = vmatprep.subr.mxu0 0.0
    %96 = vmatpush2.msra.mxu0 0.0
    %97 = vmatprep.subr.mxu0 0.0
    %98 = vmatpush2.msra.mxu0 0.0
    %99 = vmatprep.subr.mxu0 0.0
    %100 = vmatpush2.msra.mxu0 0.0
    %101 = vmatprep.mubr.f32.mxu0 0.0
    %102 = vmatmul.mubr.f32.gmra.mxu0 %v35
    %v103 = vpop.f32.mrf.mxu0
    %v104 = vadd.f32 %v31, %v103
    %v105 = vpop.f32.mrf.mxu0
    %106 = vdwg.mxu0
    %v107 = vmax.f32 %v104, 0.0
    %v108 = vld [vmem:[%s3] sm:$0xff]
    %v109 = vld [vmem:[%s3 + $0x8] sm:$0xff]
    %v110 = vld [vmem:[%s3 + $0x10] sm:$0xff]
    %v111 = vld [vmem:[%s3 + $0x18] sm:$0xff]
    %v112 = vld [vmem:[%s3 + $0x20] sm:$0xff]
    %v113 = vld [vmem:[%s3 + $0x28] sm:$0xff]
    %v114 = vld [vmem:[%s3 + $0x30] sm:$0xff]
    %v115 = vld [vmem:[%s3 + $0x38] sm:$0xff]
    %v116 = vld [vmem:[%s3 + $0x40] sm:$0xff]
    %v117 = vld [vmem:[%s3 + $0x48] sm:$0xff]
    %v118 = vld [vmem:[%s3 + $0x50] sm:$0xff]
    %v119 = vld [vmem:[%s3 + $0x58] sm:$0xff]
    %v120 = vld [vmem:[%s3 + $0x60] sm:$0xff]
    %v121 = vld [vmem:[%s3 + $0x68] sm:$0xff]
    %v122 = vld [vmem:[%s3 + $0x70] sm:$0xff]
    %v123 = vld [vmem:[%s3 + $0x78] sm:$0xff]
    %v124 = vld [vmem:[%s4] sm:$0x1]
    %v126 = vlaneseq
    %v127 = vshrl.u32 %v126, 7
    %v128 = vsub.s32 0, %v127
    %v129 = vrot.slane %v124, %v128
    %131 = vmatprep.subr.mxu0 0.0
    %132 = vmatpush1.msra.mxu0 %v123
    %133 = vmatprep.subr.mxu0 0.0
    %134 = vmatpush1.msra.mxu0 %v122
    %135 = vmatprep.subr.mxu0 0.0
    %136 = vmatpush1.msra.mxu0 %v121
    %137 = vmatprep.subr.mxu0 0.0
    %138 = vmatpush1.msra.mxu0 %v120
    %139 = vmatprep.subr.mxu0 0.0
    %140 = vmatpush1.msra.mxu0 %v119
    %141 = vmatprep.subr.mxu0 0.0
    %142 = vmatpush1.msra.mxu0 %v118
    %143 = vmatprep.subr.mxu0 0.0
    %144 = vmatpush1.msra.mxu0 %v117
    %145 = vmatprep.subr.mxu0 0.0
    %146 = vmatpush1.msra.mxu0 %v116
    %147 = vmatprep.subr.mxu0 0.0
    %148 = vmatpush1.msra.mxu0 %v115
    %149 = vmatprep.subr.mxu0 0.0
    %150 = vmatpush1.msra.mxu0 %v114
    %151 = vmatprep.subr.mxu0 0.0
    %152 = vmatpush1.msra.mxu0 %v113
    %153 = vmatprep.subr.mxu0 0.0
    %154 = vmatpush1.msra.mxu0 %v112
    %155 = vmatprep.subr.mxu0 0.0
    %156 = vmatpush1.msra.mxu0 %v111
    %157 = vmatprep.subr.mxu0 0.0
    %158 = vmatpush1.msra.mxu0 %v110
    %159 = vmatprep.subr.mxu0 0.0
    %160 = vmatpush1.msra.mxu0 %v109
    %161 = vmatprep.subr.mxu0 0.0
    %162 = vmatpush1.msra.mxu0 %v108
    %163 = vmatprep.subr.mxu0 0.0
    %164 = vmatpush2.msra.mxu0 0.0
    %165 = vmatprep.subr.mxu0 0.0
    %166 = vmatpush2.msra.mxu0 0.0
    %167 = vmatprep.subr.mxu0 0.0
    %168 = vmatpush2.msra.mxu0 0.0
    %169 = vmatprep.subr.mxu0 0.0
    %170 = vmatpush2.msra.mxu0 0.0
    %171 = vmatprep.subr.mxu0 0.0
    %172 = vmatpush2.msra.mxu0 0.0
    %173 = vmatprep.subr.mxu0 0.0
    %174 = vmatpush2.msra.mxu0 0.0
    %175 = vmatprep.subr.mxu0 0.0
    %176 = vmatpush2.msra.mxu0 0.0
    %177 = vmatprep.subr.mxu0 0.0
    %178 = vmatpush2.msra.mxu0 0.0
    %179 = vmatprep.subr.mxu0 0.0
    %180 = vmatpush2.msra.mxu0 0.0
    %181 = vmatprep.subr.mxu0 0.0
    %182 = vmatpush2.msra.mxu0 0.0
    %183 = vmatprep.subr.mxu0 0.0
    %184 = vmatpush2.msra.mxu0 0.0
    %185 = vmatprep.subr.mxu0 0.0
    %186 = vmatpush2.msra.mxu0 0.0
    %187 = vmatprep.subr.mxu0 0.0
    %188 = vmatpush2.msra.mxu0 0.0
    %189 = vmatprep.subr.mxu0 0.0
    %190 = vmatpush2.msra.mxu0 0.0
    %191 = vmatprep.subr.mxu0 0.0
    %192 = vmatpush2.msra.mxu0 0.0
    %193 = vmatprep.subr.mxu0 0.0
    %194 = vmatpush2.msra.mxu0 0.0
    %195 = vmatprep.mubr.f32.mxu0 0.0
    %196 = vmatmul.mubr.f32.gmra.mxu0 %v107
    %v197 = vpop.f32.mrf.mxu0
    %v198 = vadd.f32 %v129, %v197
    %v199 = vpop.f32.mrf.mxu0
    %200 = vdwg.mxu0
    %vm201 = vcmask 64512
    %v202 = vsel %vm201, %v198, -inf
    %203 = vmax.xlane.f32.xlu0 %v202
    %v204 = vpop.xlane.xlu0 %203
    %v205 = vsub.f32 %v198, %v204
    %v206 = vmul.f32 %v205, 1.442695
    %v207 = vpow.pop %v206
    %v208 = vsel %vm201, %v207, 0.0
    %209 = vadd.xlane.f32.xlu0 %v208
    %v210 = vpop.xlane.xlu0 %209
    %v211 = vrcp.pop %v210
    %v212 = vmul.f32 %v207, %v211
    %213 = vst.msk [vmem:[#allocation2] sm:$0xff] %vm201, %v212
    // Predicated region
    $region22: #{tpu_custom_call.1} parent=1 // pred_check
      _
    $region23: #{tpu_custom_call.1} parent=1 // pred_check_branch
      %215 = sbr.rel (0) target = $region25
    $region24: #{tpu_custom_call.1} parent=1 // pred_region
      %s217 = ssub.s32 128, 128
      %218 = vsyncadd [#allocation3], %s217
      %s220 = sshll.u32 [#allocation2], 4
      %s221 = int_to_ptr.vmem [resolvable:$true] %s220
      %223 = dma.vmem_to_hbm [thread:$0]  %s221, 128, %s5, [#allocation3]
    $region25: #{tpu_custom_call.1} parent=1 // pred_fallthru
      _
    // Predicated region
    $region26: #{tpu_custom_call.1} parent=1 // pred_check
      _
    $region27: #{tpu_custom_call.1} parent=1 // pred_check_branch
      %225 = sbr.rel (0) target = $region29
    $region28: #{tpu_custom_call.1} parent=1 // pred_region
      %226 = dma.done [#allocation3], 128
    $region29: #{tpu_custom_call.1} parent=1 // pred_fallthru
      _
    %227 = vsyncpa [#allocation3], 1

</llo_original>
